<compile_context>
chip_gen: v5e
topology: v5e:2x2
jax: 0.10.0
libtpu: 0.0.40
codegen_flags: <defaults>
</compile_context>

<pallas_src>
import functools

import jax
import jax.numpy as jnp
import numpy as np
from jax import lax
from jax.experimental import pallas as pl
from jax.experimental.pallas import tpu as pltpu


# -----------------------------------------------------------------------------
# Pallas kernel: flash-style pair-biased attention, all heads per grid step.
# -----------------------------------------------------------------------------
def _pair_bias_attn_kernel(q_ref, k_ref, v_ref, bias_ref, g_ref, o_ref,
                           m_scr, l_scr, acc_scr):
    H, _, Dh = q_ref.shape                      # (H, Tq, Dh)
    kv = pl.program_id(2)

    @pl.when(kv == 0)
    def _():
        m_scr[...] = jnp.full(m_scr.shape, -jnp.inf, jnp.float32)
        l_scr[...] = jnp.zeros(l_scr.shape, jnp.float32)
        acc_scr[...] = jnp.zeros(acc_scr.shape, jnp.float32)

    # scores: (H,Tq,Dh) x (H,Dh,Tk) -> (H,Tq,Tk), f32 accumulation on the MXU.
    s = lax.dot_general(
        q_ref[...], k_ref[...],
        dimension_numbers=(((2,), (1,)), ((0,), (0,))),
        preferred_element_type=jnp.float32)
    # bf16 bias (mask already folded to -1e30) upcast on the fly by the add.
    s = s + bias_ref[...]

    # online softmax (f32 — keeps v5e happy and accuracy tight)
    m_prev = m_scr[...]
    m_new = jnp.maximum(m_prev, jnp.max(s, axis=-1, keepdims=True))
    alpha = jnp.exp(m_prev - m_new)
    p = jnp.exp(s - m_new)
    l_scr[...] = alpha * l_scr[...] + jnp.sum(p, axis=-1, keepdims=True)

    pv = lax.dot_general(
        p.astype(v_ref.dtype), v_ref[...],
        dimension_numbers=(((2,), (1,)), ((0,), (0,))),
        preferred_element_type=jnp.float32)      # (H, Tq, Dh)
    acc_scr[...] = alpha * acc_scr[...] + pv
    m_scr[...] = m_new

    @pl.when(kv == pl.num_programs(2) - 1)
    def _():
        # normalize, merge heads into a lane-dense (Tq, H*Dh) tile, gate, store.
        out = acc_scr[...] * pl.reciprocal(l_scr[...], approx=True)  # (H,Tq,Dh)
        merged = jnp.concatenate([out[h] for h in range(H)], axis=-1)  # (Tq,H*Dh)
        gate = jax.nn.sigmoid(g_ref[...].astype(jnp.float32))
        o_ref[...] = (gate * merged).astype(o_ref.dtype)


# -----------------------------------------------------------------------------
# Tiling / VMEM sizing.
# -----------------------------------------------------------------------------
def _round_up(x, m):
    return ((x + m - 1) // m) * m


def _vmem_budget():
    """(tile-selection budget, physical VMEM capacity) in bytes."""
    try:
        cap = int(pltpu.get_tpu_info().vmem_capacity_bytes)
    except Exception:
        cap = 64 << 20              # conservative (v7x per-TC) fallback
    return int(cap * 0.7), cap


def _vmem_bytes(H, Dh, Tq, Tk, HD):
    """True per-step VMEM demand: double-buffered streams + resident scratch +
    f32 softmax intermediates (sim/p/p_bf16), with lane/sublane padding."""
    bf, f32 = 2, 4
    dh_lane = _round_up(Dh, 128)            # Dh as minor (lane) dim
    dh_sub = _round_up(Dh, 16)              # Dh as sublane dim (bf16 tiles)
    hd_lane = _round_up(HD, 128)
    n = 0
    n += 2 * H * Tq * dh_lane * bf          # q tile (x2 pipeline buffers)
    n += 2 * H * dh_sub * Tk * bf           # k tile (Dh, Tk)  lane-dense in Tk
    n += 2 * H * Tk * dh_lane * bf          # v tile
    n += 2 * H * Tq * Tk * bf               # bias tile (dominant stream)
    n += 2 * Tq * hd_lane * bf              # g tile
    n += 2 * Tq * hd_lane * bf              # out tile
    n += 2 * H * Tq * 128 * f32             # m, l scratch (lane-padded)
    n += H * Tq * dh_lane * f32             # acc scratch
    n += H * Tq * Tk * (f32 + f32 + bf)     # s (f32), p (f32), p (bf16)
    n += 2 * H * Tq * dh_lane * f32         # pv + acc-update temporaries
    return n


def _choose_tiles(N, H, Dh, HD, budget, tile_hint=None):
    """Returns (Tq, Tk, Np). Np is the (possibly padded) sequence length."""
    if tile_hint is not None:
        tq, tk = tile_hint
        Np = _round_up(N, max(tq, tk))
        assert Np % tq == 0 and Np % tk == 0
        return tq, tk, Np
    # single-tile fast path for small N (blocks == full dims, no padding)
    if N <= 512 and _vmem_bytes(H, Dh, N, N, HD) <= budget:
        return N, N, N
    Np = _round_up(N, 128)
    for tq, tk in ((256, 512), (256, 256), (128, 512), (128, 256), (128, 128)):
        if Np % tq == 0 and Np % tk == 0 and _vmem_bytes(H, Dh, tq, tk, HD) <= budget:
            return tq, tk, Np
    return 128, 128, Np


# -----------------------------------------------------------------------------
# pallas_call wrapper.
# -----------------------------------------------------------------------------
def pair_bias_attention_core(q, k, v, g, biasm, *, tile_hint=None):
    """q, v: (B,H,N,Dh) bf16 (q pre-scaled); k: (B,H,Dh,N) bf16 (lane-dense);
    g: (B,N,H*Dh) bf16; biasm: (B,H,N,N) bf16 with the mask folded in.
    Returns sigmoid(g) * attention(q,k,v,bias): (B,N,H*Dh) bf16."""
    B, H, N, Dh = q.shape
    HD = H * Dh
    budget, cap = _vmem_budget()
    Tq, Tk, Np = _choose_tiles(N, H, Dh, HD, budget, tile_hint)

    if Np != N:
        pad = Np - N
        q = jnp.pad(q, ((0, 0), (0, 0), (0, pad), (0, 0)))
        k = jnp.pad(k, ((0, 0), (0, 0), (0, 0), (0, pad)))
        v = jnp.pad(v, ((0, 0), (0, 0), (0, pad), (0, 0)))
        g = jnp.pad(g, ((0, 0), (0, pad), (0, 0)))
        # padded key columns must be "masked" so they contribute nothing
        biasm = lax.pad(biasm, jnp.array(-1e30, dtype=biasm.dtype),
                        ((0, 0, 0), (0, 0, 0), (0, pad, 0), (0, pad, 0)))

    n_q, n_kv = Np // Tq, Np // Tk

    q_spec = pl.BlockSpec((None, H, Tq, Dh), lambda b, i, j: (b, 0, i, 0))
    k_spec = pl.BlockSpec((None, H, Dh, Tk), lambda b, i, j: (b, 0, 0, j))
    v_spec = pl.BlockSpec((None, H, Tk, Dh), lambda b, i, j: (b, 0, j, 0))
    b_spec = pl.BlockSpec((None, H, Tq, Tk), lambda b, i, j: (b, 0, i, j))
    g_spec = pl.BlockSpec((None, Tq, HD), lambda b, i, j: (b, i, 0))
    o_spec = pl.BlockSpec((None, Tq, HD), lambda b, i, j: (b, i, 0))

    need = _vmem_bytes(H, Dh, Tq, Tk, HD)
    vmem_limit = int(min(cap - (4 << 20), max(32 << 20, int(need * 1.3))))

    out = pl.pallas_call(
        _pair_bias_attn_kernel,
        out_shape=jax.ShapeDtypeStruct((B, Np, HD), jnp.bfloat16),
        grid_spec=pltpu.PrefetchScalarGridSpec(
            num_scalar_prefetch=0,
            grid=(B, n_q, n_kv),
            in_specs=[q_spec, k_spec, v_spec, b_spec, g_spec],
            out_specs=o_spec,
            scratch_shapes=[
                pltpu.VMEM((H, Tq, 1), jnp.float32),    # running max
                pltpu.VMEM((H, Tq, 1), jnp.float32),    # running denom
                pltpu.VMEM((H, Tq, Dh), jnp.float32),   # running numerator
            ]),
        compiler_params=pltpu.CompilerParams(
            dimension_semantics=("parallel", "parallel", "arbitrary"),
            vmem_limit_bytes=vmem_limit),
    )(q, k, v, biasm, g)

    return out[:, :N, :] if Np != N else out


# -----------------------------------------------------------------------------
# Plain-JAX glue: layer norms and linear projections (parameter setup).
# -----------------------------------------------------------------------------
def layer_norm(x, gamma, beta, eps=1e-5):
    mu = jnp.mean(x, axis=-1, keepdims=True)
    var = jnp.mean((x - mu) ** 2, axis=-1, keepdims=True)
    return (x - mu) * jax.lax.rsqrt(var + eps) * gamma + beta


def linear(x, w, b=None):
    y = jnp.einsum("...i,io->...o", x, w)
    if b is not None:
        y = y + b
    return y


def init_params(key, node_dim, dim_head, heads, pair_dim, dim_out, bias, qkln):
    inner = dim_head * heads
    keys = jax.random.split(key, 8)

    def w(k, fan_in, fan_out):
        return (jax.random.normal(k, (fan_in, fan_out), jnp.float32)
                / jnp.sqrt(jnp.float32(fan_in)))

    p = {
        "node_norm_g": jnp.ones((node_dim,), jnp.float32),
        "node_norm_b": jnp.zeros((node_dim,), jnp.float32),
        "to_qkv_w": w(keys[0], node_dim, 3 * inner),
        "to_qkv_b": (0.01 * jax.random.normal(keys[1], (3 * inner,), jnp.float32)
                     if bias else None),
        "to_g_w": w(keys[2], node_dim, inner),
        "to_g_b": 0.01 * jax.random.normal(keys[3], (inner,), jnp.float32),
        "to_out_w": w(keys[4], inner, dim_out),
        "to_out_b": 0.01 * jax.random.normal(keys[5], (dim_out,), jnp.float32),
    }
    if qkln:
        p["q_ln_g"] = jnp.ones((inner,), jnp.float32)
        p["q_ln_b"] = jnp.zeros((inner,), jnp.float32)
        p["k_ln_g"] = jnp.ones((inner,), jnp.float32)
        p["k_ln_b"] = jnp.zeros((inner,), jnp.float32)
    if pair_dim is not None:
        p["to_bias_w"] = w(keys[6], pair_dim, heads)
        p["pair_norm_g"] = jnp.ones((pair_dim,), jnp.float32)
        p["pair_norm_b"] = jnp.zeros((pair_dim,), jnp.float32)
    return p


def pair_bias_attention(params, node_feats, pair_feats, mask, *,
                        heads, dim_head, qkln, tile_hint=None):
    B, N, _ = node_feats.shape
    scale = dim_head ** -0.5

    x = layer_norm(node_feats, params["node_norm_g"], params["node_norm_b"])
    qkv = linear(x, params["to_qkv_w"], params["to_qkv_b"])
    q, k, v = jnp.split(qkv, 3, axis=-1)
    if qkln:
        q = layer_norm(q, params["q_ln_g"], params["q_ln_b"])
        k = layer_norm(k, params["k_ln_g"], params["k_ln_b"])
    g = linear(x, params["to_g_w"], params["to_g_b"])

    # Pair-bias path: LN -> head projection -> mask fold -> bf16.  Fused by XLA
    # under jit so a single bf16 (B,H,N,N) array hits HBM.
    if pair_feats is not None:
        pf = layer_norm(pair_feats, params["pair_norm_g"], params["pair_norm_b"])
        bias = jnp.einsum("bijc,ch->bhij", pf, params["to_bias_w"])
    else:
        bias = jnp.zeros((B, heads, N, N), jnp.float32)
    if mask is not None:
        # Large finite fill: same softmax as torch's finfo.min masked_fill for
        # any row with >=1 valid key; robust to the bias add / bf16 cast.
        bias = jnp.where(mask[:, None, :, :], bias, jnp.float32(-1e30))
    biasm = bias.astype(jnp.bfloat16)

    def split_heads(t):     # (B,N,H*Dh) -> (B,H,N,Dh)
        return jnp.transpose(t.reshape(B, N, heads, dim_head), (0, 2, 1, 3))

    qh = (split_heads(q) * scale).astype(jnp.bfloat16)             # pre-scaled
    kh = jnp.transpose(split_heads(k), (0, 1, 3, 2)).astype(jnp.bfloat16)  # (B,H,Dh,N)
    vh = split_heads(v).astype(jnp.bfloat16)
    gh = g.astype(jnp.bfloat16)                                    # (B,N,H*Dh), lane-dense

    gated = pair_bias_attention_core(qh, kh, vh, gh, biasm, tile_hint=tile_hint)
    # output projection consumes the already-merged bf16 tensor directly
    return linear(gated, params["to_out_w"], params["to_out_b"])


# -----------------------------------------------------------------------------
# Pure-JAX reference (mirrors the torch forward exactly, all f32).
# -----------------------------------------------------------------------------
def reference(params, node_feats, pair_feats, mask, *, heads, dim_head, qkln):
    B, N, _ = node_feats.shape
    scale = dim_head ** -0.5
    x = layer_norm(node_feats, params["node_norm_g"], params["node_norm_b"])
    qkv = linear(x, params["to_qkv_w"], params["to_qkv_b"])
    q, k, v = jnp.split(qkv, 3, axis=-1)
    if qkln:
        q = layer_norm(q, params["q_ln_g"], params["q_ln_b"])
        k = layer_norm(k, params["k_ln_g"], params["k_ln_b"])
    g = linear(x, params["to_g_w"], params["to_g_b"])
    pf = layer_norm(pair_feats, params["pair_norm_g"], params["pair_norm_b"])
    b = jnp.einsum("bijc,ch->bhij", pf, params["to_bias_w"])
    sh = lambda t: jnp.transpose(t.reshape(B, N, heads, dim_head), (0, 2, 1, 3))
    q, k, v, g = map(sh, (q, k, v, g))
    sim = jnp.einsum("bhid,bhjd->bhij", q, k) * scale
    sim = jnp.where(mask[:, None, :, :], sim, jnp.finfo(jnp.float32).min)
    attn = jax.nn.softmax(sim + b, axis=-1)
    out = jnp.einsum("bhij,bhjd->bhid", attn, v)
    out = jax.nn.sigmoid(g) * out
    out = jnp.transpose(out, (0, 2, 1, 3)).reshape(B, N, heads * dim_head)
    return linear(out, params["to_out_w"], params["to_out_b"])


# -----------------------------------------------------------------------------
# Self-test: (1) tiny single-tile path, (2) tiled flash path with padding.
# -----------------------------------------------------------------------------
def _run_case(*, B, N, node_dim, dim_head, heads, pair_dim, dim_out,
              use_bias, qkln, tile_hint):
    key = jax.random.PRNGKey(0)
    k_param, k_node, k_pair, k_mask = jax.random.split(key, 4)
    params = init_params(k_param, node_dim, dim_head, heads, pair_dim,
                         dim_out, use_bias, qkln)
    node_feats = jax.random.normal(k_node, (B, N, node_dim), jnp.float32)
    pair_feats = jax.random.normal(k_pair, (B, N, N, pair_dim), jnp.float32)
    mask = jax.random.bernoulli(k_mask, 0.7, (B, N, N))
    mask = jnp.logical_or(mask, jnp.eye(N, dtype=bool)[None])  # no empty rows

    fwd = jax.jit(functools.partial(pair_bias_attention, heads=heads,
                                    dim_head=dim_head, qkln=qkln,
                                    tile_hint=tile_hint))
    out = jax.block_until_ready(fwd(params, node_feats, pair_feats, mask))
    ref = reference(params, node_feats, pair_feats, mask,
                    heads=heads, dim_head=dim_head, qkln=qkln)
    # Tolerance reflects intentional bf16 q/k/v/bias/g/out operands
    # (f32 accumulation + f32 softmax) and approx reciprocal.
    np.testing.assert_allclose(np.asarray(out), np.asarray(ref),
                               rtol=5e-2, atol=5e-2)


if __name__ == "__main__":
    # 1) small shapes, single-tile path (blocks == full dims)
    _run_case(B=2, N=8, node_dim=32, dim_head=8, heads=4, pair_dim=16,
              dim_out=32, use_bias=True, qkln=True, tile_hint=None)
    # 2) flash-tiled path: 128x128 tiles, N=200 padded to 256, grid (1,2,2)
    _run_case(B=1, N=200, node_dim=64, dim_head=32, heads=4, pair_dim=8,
              dim_out=48, use_bias=True, qkln=True, tile_hint=(128, 128))
    print("KERNEL_OK")
</pallas_src>

<mosaic_0001>
module attributes {stable_mosaic.version = 11 : i64} {
  func.func @_pair_bias_attn_kernel(%arg0: i32, %arg1: i32, %arg2: i32, %arg3: memref<1x4x8x8xbf16, #tpu.memory_space<vmem>>, %arg4: memref<1x4x8x8xbf16, #tpu.memory_space<vmem>>, %arg5: memref<1x4x8x8xbf16, #tpu.memory_space<vmem>>, %arg6: memref<1x4x8x8xbf16, #tpu.memory_space<vmem>>, %arg7: memref<1x8x32xbf16, #tpu.memory_space<vmem>>, %arg8: memref<1x8x32xbf16, #tpu.memory_space<vmem>>, %arg9: memref<4x8x1xf32, #tpu.memory_space<vmem>>, %arg10: memref<4x8x1xf32, #tpu.memory_space<vmem>>, %arg11: memref<4x8x8xf32, #tpu.memory_space<vmem>>) attributes {dimension_semantics = [#tpu.dimension_semantics<parallel>, #tpu.dimension_semantics<parallel>, #tpu.dimension_semantics<arbitrary>], iteration_bounds = array<i64: 2, 1, 1>, scalar_prefetch = 0 : i64, scratch_operands = 3 : i64, tpu.core_type = #tpu.core_type<tc>, window_params = [{transform_indices = @transform_0, window_bounds = array<i64: 1, 4, 8, 8>}, {transform_indices = @transform_1, window_bounds = array<i64: 1, 4, 8, 8>}, {transform_indices = @transform_2, window_bounds = array<i64: 1, 4, 8, 8>}, {transform_indices = @transform_3, window_bounds = array<i64: 1, 4, 8, 8>}, {transform_indices = @transform_4, window_bounds = array<i64: 1, 8, 32>}, {transform_indices = @transform_5, window_bounds = array<i64: 1, 8, 32>}]} {
    %c0_i32 = arith.constant 0 : i32
    %0 = arith.cmpi eq, %arg2, %c0_i32 : i32
    %1 = arith.extui %0 : i1 to i32
    %c0_i32_0 = arith.constant 0 : i32
    %2 = arith.cmpi ne, %1, %c0_i32_0 : i32
    scf.if %2 {
      %cst_39 = arith.constant 0xFF800000 : f32
      %40 = vector.broadcast %cst_39 : f32 to vector<4x8x1xf32>
      %c0_40 = arith.constant 0 : index
      %c0_41 = arith.constant 0 : index
      %c0_42 = arith.constant 0 : index
      %41 = vector.load %arg9[%c0_40, %c0_41, %c0_42] : memref<4x8x1xf32, #tpu.memory_space<vmem>>, vector<4x8x1xf32>
      tpu.vector_store %arg9[%c0_40, %c0_41, %c0_42], %40 {strides = array<i32>} : memref<4x8x1xf32, #tpu.memory_space<vmem>>, vector<4x8x1xf32>,
      %cst_43 = arith.constant 0.000000e+00 : f32
      %42 = vector.broadcast %cst_43 : f32 to vector<4x8x1xf32>
      %c0_44 = arith.constant 0 : index
      %c0_45 = arith.constant 0 : index
      %c0_46 = arith.constant 0 : index
      %43 = vector.load %arg10[%c0_44, %c0_45, %c0_46] : memref<4x8x1xf32, #tpu.memory_space<vmem>>, vector<4x8x1xf32>
      tpu.vector_store %arg10[%c0_44, %c0_45, %c0_46], %42 {strides = array<i32>} : memref<4x8x1xf32, #tpu.memory_space<vmem>>, vector<4x8x1xf32>,
      %cst_47 = arith.constant 0.000000e+00 : f32
      %44 = vector.broadcast %cst_47 : f32 to vector<4x8x8xf32>
      %c0_48 = arith.constant 0 : index
      %c0_49 = arith.constant 0 : index
      %c0_50 = arith.constant 0 : index
      %45 = vector.load %arg11[%c0_48, %c0_49, %c0_50] : memref<4x8x8xf32, #tpu.memory_space<vmem>>, vector<4x8x8xf32>
      tpu.vector_store %arg11[%c0_48, %c0_49, %c0_50], %44 {strides = array<i32>} : memref<4x8x8xf32, #tpu.memory_space<vmem>>, vector<4x8x8xf32>,
    } else {
    }
    %c0 = arith.constant 0 : index
    %c0_1 = arith.constant 0 : index
    %c0_2 = arith.constant 0 : index
    %c0_3 = arith.constant 0 : index
    %3 = vector.load %arg3[%c0, %c0_1, %c0_2, %c0_3] : memref<1x4x8x8xbf16, #tpu.memory_space<vmem>>, vector<1x4x8x8xbf16>
    %4 = vector.shape_cast %3 : vector<1x4x8x8xbf16> to vector<4x8x8xbf16>
    %c0_4 = arith.constant 0 : index
    %c0_5 = arith.constant 0 : index
    %c0_6 = arith.constant 0 : index
    %c0_7 = arith.constant 0 : index
    %5 = vector.load %arg4[%c0_4, %c0_5, %c0_6, %c0_7] : memref<1x4x8x8xbf16, #tpu.memory_space<vmem>>, vector<1x4x8x8xbf16>
    %6 = vector.shape_cast %5 : vector<1x4x8x8xbf16> to vector<4x8x8xbf16>
    %cst = arith.constant dense<0.000000e+00> : vector<4x8x8xf32>
    %7 = tpu.matmul %4, %6, %cst {dimension_numbers = #tpu.dot_dimension_numbers<[2], [1], [1], [2], [0, 0, 0, 1, 1, 2], [0], [0]>} : vector<4x8x8xbf16>, vector<4x8x8xbf16>, vector<4x8x8xf32> -> vector<4x8x8xf32>
    %c0_8 = arith.constant 0 : index
    %c0_9 = arith.constant 0 : index
    %c0_10 = arith.constant 0 : index
    %c0_11 = arith.constant 0 : index
    %8 = vector.load %arg6[%c0_8, %c0_9, %c0_10, %c0_11] : memref<1x4x8x8xbf16, #tpu.memory_space<vmem>>, vector<1x4x8x8xbf16>
    %9 = vector.shape_cast %8 : vector<1x4x8x8xbf16> to vector<4x8x8xbf16>
    %10 = arith.extf %9 : vector<4x8x8xbf16> to vector<4x8x8xf32>
    %11 = arith.addf %7, %10 : vector<4x8x8xf32>
    %c0_12 = arith.constant 0 : index
    %c0_13 = arith.constant 0 : index
    %c0_14 = arith.constant 0 : index
    %12 = vector.load %arg9[%c0_12, %c0_13, %c0_14] : memref<4x8x1xf32, #tpu.memory_space<vmem>>, vector<4x8x1xf32>
    %cst_15 = arith.constant dense<0xFF800000> : vector<4x8xf32>
    %13 = vector.multi_reduction <maximumf>, %11, %cst_15 [2] : vector<4x8x8xf32> to vector<4x8xf32>
    %14 = vector.shape_cast %13 : vector<4x8xf32> to vector<4x8x1xf32>
    %15 = arith.maximumf %12, %14 : vector<4x8x1xf32>
    %16 = arith.subf %12, %15 : vector<4x8x1xf32>
    %17 = math.exp %16 : vector<4x8x1xf32>
    %18 = vector.broadcast %15 : vector<4x8x1xf32> to vector<4x8x8xf32>
    %19 = arith.subf %11, %18 : vector<4x8x8xf32>
    %20 = math.exp %19 : vector<4x8x8xf32>
    %c0_16 = arith.constant 0 : index
    %c0_17 = arith.constant 0 : index
    %c0_18 = arith.constant 0 : index
    %21 = vector.load %arg10[%c0_16, %c0_17, %c0_18] : memref<4x8x1xf32, #tpu.memory_space<vmem>>, vector<4x8x1xf32>
    %22 = arith.mulf %17, %21 : vector<4x8x1xf32>
    %cst_19 = arith.constant dense<0.000000e+00> : vector<4x8xf32>
    %23 = vector.multi_reduction <add>, %20, %cst_19 [2] : vector<4x8x8xf32> to vector<4x8xf32>
    %24 = vector.shape_cast %23 : vector<4x8xf32> to vector<4x8x1xf32>
    %25 = arith.addf %22, %24 : vector<4x8x1xf32>
    %c0_20 = arith.constant 0 : index
    %c0_21 = arith.constant 0 : index
    %c0_22 = arith.constant 0 : index
    %26 = vector.load %arg10[%c0_20, %c0_21, %c0_22] : memref<4x8x1xf32, #tpu.memory_space<vmem>>, vector<4x8x1xf32>
    tpu.vector_store %arg10[%c0_20, %c0_21, %c0_22], %25 {strides = array<i32>} : memref<4x8x1xf32, #tpu.memory_space<vmem>>, vector<4x8x1xf32>,
    %27 = arith.truncf %20 : vector<4x8x8xf32> to vector<4x8x8xbf16>
    %c0_23 = arith.constant 0 : index
    %c0_24 = arith.constant 0 : index
    %c0_25 = arith.constant 0 : index
    %c0_26 = arith.constant 0 : index
    %28 = vector.load %arg5[%c0_23, %c0_24, %c0_25, %c0_26] : memref<1x4x8x8xbf16, #tpu.memory_space<vmem>>, vector<1x4x8x8xbf16>
    %29 = vector.shape_cast %28 : vector<1x4x8x8xbf16> to vector<4x8x8xbf16>
    %cst_27 = arith.constant dense<0.000000e+00> : vector<4x8x8xf32>
    %30 = tpu.matmul %27, %29, %cst_27 {dimension_numbers = #tpu.dot_dimension_numbers<[2], [1], [1], [2], [0, 0, 0, 1, 1, 2], [0], [0]>} : vector<4x8x8xbf16>, vector<4x8x8xbf16>, vector<4x8x8xf32> -> vector<4x8x8xf32>
    %c0_28 = arith.constant 0 : index
    %c0_29 = arith.constant 0 : index
    %c0_30 = arith.constant 0 : index
    %31 = vector.load %arg11[%c0_28, %c0_29, %c0_30] : memref<4x8x8xf32, #tpu.memory_space<vmem>>, vector<4x8x8xf32>
    %32 = vector.broadcast %17 : vector<4x8x1xf32> to vector<4x8x8xf32>
    %33 = arith.mulf %32, %31 : vector<4x8x8xf32>
    %34 = arith.addf %33, %30 : vector<4x8x8xf32>
    %c0_31 = arith.constant 0 : index
    %c0_32 = arith.constant 0 : index
    %c0_33 = arith.constant 0 : index
    %35 = vector.load %arg11[%c0_31, %c0_32, %c0_33] : memref<4x8x8xf32, #tpu.memory_space<vmem>>, vector<4x8x8xf32>
    tpu.vector_store %arg11[%c0_31, %c0_32, %c0_33], %34 {strides = array<i32>} : memref<4x8x8xf32, #tpu.memory_space<vmem>>, vector<4x8x8xf32>,
    %c0_34 = arith.constant 0 : index
    %c0_35 = arith.constant 0 : index
    %c0_36 = arith.constant 0 : index
    %36 = vector.load %arg9[%c0_34, %c0_35, %c0_36] : memref<4x8x1xf32, #tpu.memory_space<vmem>>, vector<4x8x1xf32>
    tpu.vector_store %arg9[%c0_34, %c0_35, %c0_36], %15 {strides = array<i32>} : memref<4x8x1xf32, #tpu.memory_space<vmem>>, vector<4x8x1xf32>,
    %c0_i32_37 = arith.constant 0 : i32
    %37 = arith.cmpi eq, %arg2, %c0_i32_37 : i32
    %38 = arith.extui %37 : i1 to i32
    %c0_i32_38 = arith.constant 0 : i32
    %39 = arith.cmpi ne, %38, %c0_i32_38 : i32
    scf.if %39 {
      %c0_39 = arith.constant 0 : index
      %c0_40 = arith.constant 0 : index
      %c0_41 = arith.constant 0 : index
      %40 = vector.load %arg11[%c0_39, %c0_40, %c0_41] : memref<4x8x8xf32, #tpu.memory_space<vmem>>, vector<4x8x8xf32>
      %c0_42 = arith.constant 0 : index
      %c0_43 = arith.constant 0 : index
      %c0_44 = arith.constant 0 : index
      %41 = vector.load %arg10[%c0_42, %c0_43, %c0_44] : memref<4x8x1xf32, #tpu.memory_space<vmem>>, vector<4x8x1xf32>
      %42 = tpu.reciprocal %41 {approx = true} : vector<4x8x1xf32> -> vector<4x8x1xf32>
      %43 = vector.broadcast %42 : vector<4x8x1xf32> to vector<4x8x8xf32>
      %44 = arith.mulf %40, %43 : vector<4x8x8xf32>
      %45 = vector.extract_strided_slice %44 {offsets = [0, 0, 0], sizes = [1, 8, 8], strides = [1, 1, 1]} : vector<4x8x8xf32> to vector<1x8x8xf32>
      %46 = vector.shape_cast %45 : vector<1x8x8xf32> to vector<8x8xf32>
      %47 = vector.extract_strided_slice %44 {offsets = [1, 0, 0], sizes = [1, 8, 8], strides = [1, 1, 1]} : vector<4x8x8xf32> to vector<1x8x8xf32>
      %48 = vector.shape_cast %47 : vector<1x8x8xf32> to vector<8x8xf32>
      %49 = vector.extract_strided_slice %44 {offsets = [2, 0, 0], sizes = [1, 8, 8], strides = [1, 1, 1]} : vector<4x8x8xf32> to vector<1x8x8xf32>
      %50 = vector.shape_cast %49 : vector<1x8x8xf32> to vector<8x8xf32>
      %51 = vector.extract_strided_slice %44 {offsets = [3, 0, 0], sizes = [1, 8, 8], strides = [1, 1, 1]} : vector<4x8x8xf32> to vector<1x8x8xf32>
      %52 = vector.shape_cast %51 : vector<1x8x8xf32> to vector<8x8xf32>
      %53 = tpu.concatenate %46, %48, %50, %52 in 1 : vector<8x8xf32>, vector<8x8xf32>, vector<8x8xf32>, vector<8x8xf32> -> vector<8x32xf32>
      %c0_45 = arith.constant 0 : index
      %c0_46 = arith.constant 0 : index
      %c0_47 = arith.constant 0 : index
      %54 = vector.load %arg7[%c0_45, %c0_46, %c0_47] : memref<1x8x32xbf16, #tpu.memory_space<vmem>>, vector<1x8x32xbf16>
      %55 = vector.shape_cast %54 : vector<1x8x32xbf16> to vector<8x32xbf16>
      %56 = arith.extf %55 : vector<8x32xbf16> to vector<8x32xf32>
      %57 = arith.negf %56 : vector<8x32xf32>
      %58 = math.exp %57 : vector<8x32xf32>
      %cst_48 = arith.constant 1.000000e+00 : f32
      %59 = vector.broadcast %cst_48 : f32 to vector<8x32xf32>
      %60 = arith.addf %59, %58 : vector<8x32xf32>
      %61 = arith.divf %59, %60 : vector<8x32xf32>
      %62 = arith.mulf %61, %53 : vector<8x32xf32>
      %63 = arith.truncf %62 : vector<8x32xf32> to vector<8x32xbf16>
      %c0_49 = arith.constant 0 : index
      %c0_50 = arith.constant 0 : index
      %c0_51 = arith.constant 0 : index
      %64 = vector.load %arg8[%c0_49, %c0_50, %c0_51] : memref<1x8x32xbf16, #tpu.memory_space<vmem>>, vector<1x8x32xbf16>
      %65 = vector.shape_cast %64 : vector<1x8x32xbf16> to vector<8x32xbf16>
      %66 = vector.shape_cast %63 : vector<8x32xbf16> to vector<1x8x32xbf16>
      tpu.vector_store %arg8[%c0_49, %c0_50, %c0_51], %66 {strides = array<i32>} : memref<1x8x32xbf16, #tpu.memory_space<vmem>>, vector<1x8x32xbf16>,
    } else {
    }
    return
  }
  func.func @transform_0(%arg0: i32, %arg1: i32, %arg2: i32) -> (i32, i32, i32, i32) {
    %c0_i32 = arith.constant 0 : i32
    %c0_i32_0 = arith.constant 0 : i32
    %c0_i32_1 = arith.constant 0 : i32
    return %arg0, %c0_i32, %arg1, %c0_i32_0 : i32, i32, i32, i32
  }
  func.func @transform_1(%arg0: i32, %arg1: i32, %arg2: i32) -> (i32, i32, i32, i32) {
    %c0_i32 = arith.constant 0 : i32
    %c0_i32_0 = arith.constant 0 : i32
    %c0_i32_1 = arith.constant 0 : i32
    return %arg0, %c0_i32, %c0_i32_0, %arg2 : i32, i32, i32, i32
  }
  func.func @transform_2(%arg0: i32, %arg1: i32, %arg2: i32) -> (i32, i32, i32, i32) {
    %c0_i32 = arith.constant 0 : i32
    %c0_i32_0 = arith.constant 0 : i32
    %c0_i32_1 = arith.constant 0 : i32
    return %arg0, %c0_i32, %arg2, %c0_i32_0 : i32, i32, i32, i32
  }
  func.func @transform_3(%arg0: i32, %arg1: i32, %arg2: i32) -> (i32, i32, i32, i32) {
    %c0_i32 = arith.constant 0 : i32
    %c0_i32_0 = arith.constant 0 : i32
    return %arg0, %c0_i32, %arg1, %arg2 : i32, i32, i32, i32
  }
  func.func @transform_4(%arg0: i32, %arg1: i32, %arg2: i32) -> (i32, i32, i32) {
    %c0_i32 = arith.constant 0 : i32
    %c0_i32_0 = arith.constant 0 : i32
    return %arg0, %arg1, %c0_i32 : i32, i32, i32
  }
  func.func @transform_5(%arg0: i32, %arg1: i32, %arg2: i32) -> (i32, i32, i32) {
    %c0_i32 = arith.constant 0 : i32
    %c0_i32_0 = arith.constant 0 : i32
    return %arg0, %arg1, %c0_i32 : i32, i32, i32
  }
}

</mosaic_0001>

<llo_original>
// kernel: split.20
$region0: #{split.20}
  #allocation0 [shape = 'u32[2048]{0}', space=vmem, size = 0x2000, scoped, tag = 'scoped memory for split.20']
  #allocation1 [shape = 'u32[2048]{0}', space=vmem, size = 0x2000, scoped, tag = 'scoped memory for split.20']
  #allocation2 [shape = 'u32[2048]{0}', space=vmem, size = 0x2000, scoped, tag = 'scoped memory for split.20']
  #allocation3 [shape = 'u32[2048]{0}', space=vmem, size = 0x2000, scoped, tag = 'scoped memory for split.20']
  #allocation4 [shape = 'u32[2048]{0}', space=vmem, size = 0x2000, scoped, tag = 'scoped memory for split.20']
  #allocation5 [shape = 's32[1]{0}', space=sflag, size = 0x4, scoped, tag = 'scoped memory for split.20']
  %s0 = inlined_call_operand.vmem [shape: f32[2,8,96], index: 0, kind: input, shape index: {}]
  %s1 = inlined_call_operand.vmem [shape: bf16[2,8,32], index: 1, kind: output, shape index: {}]
  %v2 = vld [vmem:[%s0] sm:$0xff]
  %v3 = vlaneseq
  %v4 = vand.u32 %v3, 127
  %vm5 = vcmp.lt.s32.totalorder %v4, 64
  %v6 = vsel %vm5, 0, %v2
  %7 = vrot.lane.b32.xlu0 %v6, 64
  %v8 = vpop.permute.xlu0 %7
  %v9 = vpack.i.bf16 %v8, 0.0
  %v10 = vpack.c.bf16 0.0, %v9
  %11 = vst [vmem:[%s1] sm:$0xf] %v10
  %s12 = scalar_lea.vmem %s0, 8
  %v13 = vld [vmem:[%s12] sm:$0xff]
  %v14 = vlaneseq
  %v15 = vand.u32 %v14, 127
  %vm16 = vcmp.lt.s32.totalorder %v15, 64
  %v17 = vsel %vm16, 0, %v13
  %18 = vrot.lane.b32.xlu0 %v17, 64
  %v19 = vpop.permute.xlu0 %18
  %v20 = vpack.i.bf16 %v19, 0.0
  %s21 = scalar_lea.vmem %s1, 4
  %v22 = vpack.c.bf16 0.0, %v20
  %23 = vst [vmem:[%s21] sm:$0xf] %v22

// kernel: pair_bias_attention.1
$region0: #{pair_bias_attention.1}
  #allocation0 [shape = 'u32[]', space=smem, size = 0x4, offset = 0x4, fixed_abs, tag = 'smem constant byte address 0x4 - core index']
  #allocation1 [shape = 'u32[72,128]{1,0:T(1,128)}', space=vmem, size = 0x9000, scoped, tag = 'internal scratch']
  #allocation2 [shape = 'f32[4,8,1]{2,1,0:T(8,128)}', space=vmem, size = 0x4000, scoped, tag = 'scratch operand']
  #allocation3 [shape = 'f32[4,8,1]{2,1,0:T(8,128)}', space=vmem, size = 0x4000, scoped, tag = 'scratch operand']
  #allocation4 [shape = 'f32[4,8,8]{2,1,0:T(8,128)}', space=vmem, size = 0x4000, scoped, tag = 'scratch operand']
  %s0 = inlined_call_operand.vmem [shape: bf16[2,4,8,8], index: 0, kind: input, shape index: {}]
  %s1 = inlined_call_operand.vmem [shape: bf16[2,4,8,8], index: 1, kind: input, shape index: {}]
  %s2 = inlined_call_operand.vmem [shape: bf16[2,4,8,8], index: 2, kind: input, shape index: {}]
  %s3 = inlined_call_operand.vmem [shape: bf16[2,4,8,8], index: 3, kind: input, shape index: {}]
  %s4 = inlined_call_operand.vmem [shape: bf16[2,8,32], index: 4, kind: input, shape index: {}]
  %s5 = inlined_call_operand.vmem [shape: bf16[2,8,32], index: 5, kind: output, shape index: {}]
  %s6 = sld [smem:[#allocation0]]
  $region61: #{pair_bias_attention.1} parent=0
    _
  %s8 = ssub.s32 1, %s6
  %s9 = scalar_select 0, %s8, %s6
  loop: start=0, step=1, limit=4
  $region2: #{pair_bias_attention.1} parent=0 // loop_pre_header
    _
  $region3: #{pair_bias_attention.1} parent=0 // loop_header
    %s11 = sphi 0, %s15
    %p12 = scmp.ge.s32.totalorder %s11, 4
    %s18 = sphi 0, %s37
    %s19 = sphi 0, %s33
    %s20 = sphi 0, %s29
    %s21 = sphi 0, %s18
    %s22 = sphi 0, %s19
    %s23 = sphi 0, %s20
    %s24 = sphi 0, %s21
    %s25 = sphi 0, %s22
    %s26 = sphi 0, %s23
    %s42 = sphi 0, %s44
    %s45 = sphi 0, %s42
    %s46 = sphi 0, %s45
    %s62 = sphi 0, %s46
    %s70 = sphi 0, %s72
    %s73 = sphi 0, %s70
    %s74 = sphi 0, %s73
    %s90 = sphi 0, %s74
    %s98 = sphi 0, %s100
    %s101 = sphi 0, %s98
    %s102 = sphi 0, %s101
    %s118 = sphi 0, %s102
    %s128 = sphi 0, %s130
    %s131 = sphi 0, %s128
    %s132 = sphi 0, %s131
    %s148 = sphi 0, %s132
    %s156 = sphi 0, %s158
    %s159 = sphi 0, %s156
    %s160 = sphi 0, %s159
    %s176 = sphi 0, %s160
    %s184 = sphi 0, %s186
    %s187 = sphi 0, %s184
    %s188 = sphi 0, %s187
    %s204 = sphi 0, %s188
  $region4: #{pair_bias_attention.1} parent=0 // loop_header_branch
    %14 = sbr.rel (%p12) target = $region8
  $region5: #{pair_bias_attention.1} parent=0 // loop_body
    %s16 = ssub.s32 %s11, 1
    %s17 = ssub.s32 %s11, 2
    %s27 = sadd.s32 1, %s20
    %p28 = scmp.ge.s32.totalorder %s27, 1
    %s29 = scalar_select %p28, 0, %s27
    %s30 = sadd.s32 1, %s19
    %s31 = scalar_select %p28, %s30, %s19
    %p32 = scmp.ge.s32.totalorder %s31, 1
    %s33 = scalar_select %p32, 0, %s31
    %s34 = sadd.s32 1, %s18
    %s35 = scalar_select %p32, %s34, %s18
    %p36 = scmp.ge.s32.totalorder %s35, 2
    %s37 = scalar_select %p36, 0, %s35
    %s38 = ssub.s32 %s18, %s37
    %s39 = ssub.s32 %s19, %s33
    %s40 = sor.u32 %s38, %s39
    %p41 = scmp.eq.s32.totalorder %s40, 0
    %s43 = sadd.s32 %s42, 1
    %s44 = scalar_select %p41, %s42, %s43
    %p47 = pneg %p41
    %p48 = scmp.eq.s32.totalorder %s11, 1
    %p49 = por %p47, %p48
    %p50 = scmp.ne.s32.totalorder %s42, %s45
    %p51 = scmp.eq.s32.totalorder %s11, 0
    %p52 = por %p50, %p51
    %p53 = scmp.ne.s32.totalorder %s42, %s45
    %p54 = scmp.eq.s32.totalorder %s16, 1
    %p55 = por %p53, %p54
    %p56 = scmp.ne.s32.totalorder %s45, %s46
    %p57 = scmp.eq.s32.totalorder %s16, 0
    %p58 = por %p56, %p57
    %p59 = scmp.ne.s32.totalorder %s45, %s46
    %p60 = scmp.eq.s32.totalorder %s17, 1
    %p61 = por %p59, %p60
    %p63 = scmp.ne.s32.totalorder %s46, %s62
    %p64 = scmp.eq.s32.totalorder %s17, 0
    %p65 = por %p63, %p64
    %s66 = ssub.s32 %s18, %s37
    %s67 = ssub.s32 %s20, %s29
    %s68 = sor.u32 %s66, %s67
    %p69 = scmp.eq.s32.totalorder %s68, 0
    %s71 = sadd.s32 %s70, 1
    %s72 = scalar_select %p69, %s70, %s71
    %p75 = pneg %p69
    %p76 = scmp.eq.s32.totalorder %s11, 1
    %p77 = por %p75, %p76
    %p78 = scmp.ne.s32.totalorder %s70, %s73
    %p79 = scmp.eq.s32.totalorder %s11, 0
    %p80 = por %p78, %p79
    %p81 = scmp.ne.s32.totalorder %s70, %s73
    %p82 = scmp.eq.s32.totalorder %s16, 1
    %p83 = por %p81, %p82
    %p84 = scmp.ne.s32.totalorder %s73, %s74
    %p85 = scmp.eq.s32.totalorder %s16, 0
    %p86 = por %p84, %p85
    %p87 = scmp.ne.s32.totalorder %s73, %s74
    %p88 = scmp.eq.s32.totalorder %s17, 1
    %p89 = por %p87, %p88
    %p91 = scmp.ne.s32.totalorder %s74, %s90
    %p92 = scmp.eq.s32.totalorder %s17, 0
    %p93 = por %p91, %p92
    %s94 = ssub.s32 %s18, %s37
    %s95 = ssub.s32 %s20, %s29
    %s96 = sor.u32 %s94, %s95
    %p97 = scmp.eq.s32.totalorder %s96, 0
    %s99 = sadd.s32 %s98, 1
    %s100 = scalar_select %p97, %s98, %s99
    %p103 = pneg %p97
    %p104 = scmp.eq.s32.totalorder %s11, 1
    %p105 = por %p103, %p104
    %p106 = scmp.ne.s32.totalorder %s98, %s101
    %p107 = scmp.eq.s32.totalorder %s11, 0
    %p108 = por %p106, %p107
    %p109 = scmp.ne.s32.totalorder %s98, %s101
    %p110 = scmp.eq.s32.totalorder %s16, 1
    %p111 = por %p109, %p110
    %p112 = scmp.ne.s32.totalorder %s101, %s102
    %p113 = scmp.eq.s32.totalorder %s16, 0
    %p114 = por %p112, %p113
    %p115 = scmp.ne.s32.totalorder %s101, %s102
    %p116 = scmp.eq.s32.totalorder %s17, 1
    %p117 = por %p115, %p116
    %p119 = scmp.ne.s32.totalorder %s102, %s118
    %p120 = scmp.eq.s32.totalorder %s17, 0
    %p121 = por %p119, %p120
    %s122 = ssub.s32 %s18, %s37
    %s123 = ssub.s32 %s19, %s33
    %s124 = sor.u32 %s122, %s123
    %s125 = ssub.s32 %s20, %s29
    %s126 = sor.u32 %s124, %s125
    %p127 = scmp.eq.s32.totalorder %s126, 0
    %s129 = sadd.s32 %s128, 1
    %s130 = scalar_select %p127, %s128, %s129
    %p133 = pneg %p127
    %p134 = scmp.eq.s32.totalorder %s11, 1
    %p135 = por %p133, %p134
    %p136 = scmp.ne.s32.totalorder %s128, %s131
    %p137 = scmp.eq.s32.totalorder %s11, 0
    %p138 = por %p136, %p137
    %p139 = scmp.ne.s32.totalorder %s128, %s131
    %p140 = scmp.eq.s32.totalorder %s16, 1
    %p141 = por %p139, %p140
    %p142 = scmp.ne.s32.totalorder %s131, %s132
    %p143 = scmp.eq.s32.totalorder %s16, 0
    %p144 = por %p142, %p143
    %p145 = scmp.ne.s32.totalorder %s131, %s132
    %p146 = scmp.eq.s32.totalorder %s17, 1
    %p147 = por %p145, %p146
    %p149 = scmp.ne.s32.totalorder %s132, %s148
    %p150 = scmp.eq.s32.totalorder %s17, 0
    %p151 = por %p149, %p150
    %s152 = ssub.s32 %s18, %s37
    %s153 = ssub.s32 %s19, %s33
    %s154 = sor.u32 %s152, %s153
    %p155 = scmp.eq.s32.totalorder %s154, 0
    %s157 = sadd.s32 %s156, 1
    %s158 = scalar_select %p155, %s156, %s157
    %p161 = pneg %p155
    %p162 = scmp.eq.s32.totalorder %s11, 1
    %p163 = por %p161, %p162
    %p164 = scmp.ne.s32.totalorder %s156, %s159
    %p165 = scmp.eq.s32.totalorder %s11, 0
    %p166 = por %p164, %p165
    %p167 = scmp.ne.s32.totalorder %s156, %s159
    %p168 = scmp.eq.s32.totalorder %s16, 1
    %p169 = por %p167, %p168
    %p170 = scmp.ne.s32.totalorder %s159, %s160
    %p171 = scmp.eq.s32.totalorder %s16, 0
    %p172 = por %p170, %p171
    %p173 = scmp.ne.s32.totalorder %s159, %s160
    %p174 = scmp.eq.s32.totalorder %s17, 1
    %p175 = por %p173, %p174
    %p177 = scmp.ne.s32.totalorder %s160, %s176
    %p178 = scmp.eq.s32.totalorder %s17, 0
    %p179 = por %p177, %p178
    %s180 = ssub.s32 %s18, %s37
    %s181 = ssub.s32 %s19, %s33
    %s182 = sor.u32 %s180, %s181
    %p183 = scmp.eq.s32.totalorder %s182, 0
    %s185 = sadd.s32 %s184, 1
    %s186 = scalar_select %p183, %s184, %s185
    %p189 = pneg %p183
    %p190 = scmp.eq.s32.totalorder %s11, 1
    %p191 = por %p189, %p190
    %p192 = scmp.ne.s32.totalorder %s184, %s187
    %p193 = scmp.eq.s32.totalorder %s11, 0
    %p194 = por %p192, %p193
    %p195 = scmp.ne.s32.totalorder %s184, %s187
    %p196 = scmp.eq.s32.totalorder %s16, 1
    %p197 = por %p195, %p196
    %p198 = scmp.ne.s32.totalorder %s187, %s188
    %p199 = scmp.eq.s32.totalorder %s16, 0
    %p200 = por %p198, %p199
    %p201 = scmp.ne.s32.totalorder %s187, %s188
    %p202 = scmp.eq.s32.totalorder %s17, 1
    %p203 = por %p201, %p202
    %p205 = scmp.ne.s32.totalorder %s188, %s204
    %p206 = scmp.eq.s32.totalorder %s17, 0
    %p207 = por %p205, %p206
    %p208 = scmp.le.s32.totalorder 1, %s11
    %p209 = scmp.lt.s32.totalorder %s11, 3
    %p210 = pnand %p208, %p209
    %p211 = pneg %p210
    // Predicated region
    $region9: #{pair_bias_attention.1} parent=5 // pred_check
      _
    $region10: #{pair_bias_attention.1} parent=5 // pred_check_branch
      %213 = sbr.rel (%p210) target = $region12
    $region11: #{pair_bias_attention.1} parent=5 // pred_region
      %s214 = ssub.s32 %s11, 1
    $region12: #{pair_bias_attention.1} parent=5 // pred_fallthru
      _
    %p215 = scmp.lt.s32.totalorder %s11, 2
    // Predicated region
    $region13: #{pair_bias_attention.1} parent=5 // pred_check
      %p216 = pneg %p215
    $region14: #{pair_bias_attention.1} parent=5 // pred_check_branch
      %218 = sbr.rel (%p216) target = $region16
    $region15: #{pair_bias_attention.1} parent=5 // pred_region
      // Predicated region
      $region17: #{pair_bias_attention.1} parent=15 // pred_check
        %p219 = pneg %p52
      $region18: #{pair_bias_attention.1} parent=15 // pred_check_branch
        %221 = sbr.rel (%p219) target = $region20
      $region19: #{pair_bias_attention.1} parent=15 // pred_region
        %p222 = scmp.lt.s32.totalorder %s18, 1
        %s223 = scalar_select %p222, %s18, 1
        %p224 = scmp.lt.s32.totalorder %s19, 0
        %s225 = scalar_select %p224, %s19, 0
        %s226 = smul.addr %s223, 4
        %s227 = sadd.s32 %s225, %s226
        %s228 = smul.addr %s227, 4
        %s229 = scalar_lea.vmem %s0, %s228
      $region20: #{pair_bias_attention.1} parent=15 // pred_fallthru
        _
      // Predicated region
      $region21: #{pair_bias_attention.1} parent=15 // pred_check
        %p230 = pneg %p80
      $region22: #{pair_bias_attention.1} parent=15 // pred_check_branch
        %232 = sbr.rel (%p230) target = $region24
      $region23: #{pair_bias_attention.1} parent=15 // pred_region
        %p233 = scmp.lt.s32.totalorder %s18, 1
        %s234 = scalar_select %p233, %s18, 1
        %p235 = scmp.lt.s32.totalorder %s20, 0
        %s236 = scalar_select %p235, %s20, 0
        %s237 = smul.addr %s234, 4
        %s238 = sadd.s32 %s236, %s237
        %s239 = smul.addr %s238, 4
        %s240 = scalar_lea.vmem %s1, %s239
      $region24: #{pair_bias_attention.1} parent=15 // pred_fallthru
        _
      // Predicated region
      $region25: #{pair_bias_attention.1} parent=15 // pred_check
        %p241 = pneg %p108
      $region26: #{pair_bias_attention.1} parent=15 // pred_check_branch
        %243 = sbr.rel (%p241) target = $region28
      $region27: #{pair_bias_attention.1} parent=15 // pred_region
        %p244 = scmp.lt.s32.totalorder %s18, 1
        %s245 = scalar_select %p244, %s18, 1
        %p246 = scmp.lt.s32.totalorder %s20, 0
        %s247 = scalar_select %p246, %s20, 0
        %s248 = smul.addr %s245, 4
        %s249 = sadd.s32 %s247, %s248
        %s250 = smul.addr %s249, 4
        %s251 = scalar_lea.vmem %s2, %s250
      $region28: #{pair_bias_attention.1} parent=15 // pred_fallthru
        _
      // Predicated region
      $region29: #{pair_bias_attention.1} parent=15 // pred_check
        %p252 = pneg %p138
      $region30: #{pair_bias_attention.1} parent=15 // pred_check_branch
        %254 = sbr.rel (%p252) target = $region32
      $region31: #{pair_bias_attention.1} parent=15 // pred_region
        %p255 = scmp.lt.s32.totalorder %s18, 1
        %s256 = scalar_select %p255, %s18, 1
        %p257 = scmp.lt.s32.totalorder %s19, 0
        %s258 = scalar_select %p257, %s19, 0
        %p259 = scmp.lt.s32.totalorder %s20, 0
        %s260 = scalar_select %p259, %s20, 0
        %s261 = sadd.s32 %s260, %s258
        %s262 = smul.addr %s256, 4
        %s263 = sadd.s32 %s261, %s262
        %s264 = smul.addr %s263, 4
        %s265 = scalar_lea.vmem %s3, %s264
      $region32: #{pair_bias_attention.1} parent=15 // pred_fallthru
        _
      // Predicated region
      $region33: #{pair_bias_attention.1} parent=15 // pred_check
        %p266 = pneg %p166
      $region34: #{pair_bias_attention.1} parent=15 // pred_check_branch
        %268 = sbr.rel (%p266) target = $region36
      $region35: #{pair_bias_attention.1} parent=15 // pred_region
        %p269 = scmp.lt.s32.totalorder %s18, 1
        %s270 = scalar_select %p269, %s18, 1
        %p271 = scmp.lt.s32.totalorder %s19, 0
        %s272 = scalar_select %p271, %s19, 0
        %s273 = sadd.s32 %s272, %s270
        %s274 = smul.addr %s273, 4
        %s275 = scalar_lea.vmem %s4, %s274
      $region36: #{pair_bias_attention.1} parent=15 // pred_fallthru
        _
    $region16: #{pair_bias_attention.1} parent=5 // pred_fallthru
      _
    %p276 = scmp.le.s32.totalorder 1, %s11
    %p277 = scmp.lt.s32.totalorder %s11, 3
    %p278 = pnand %p276, %p277
    %p279 = pneg %p278
    // Predicated region
    $region37: #{pair_bias_attention.1} parent=5 // pred_check
      _
    $region38: #{pair_bias_attention.1} parent=5 // pred_check_branch
      %281 = sbr.rel (%p278) target = $region40
    $region39: #{pair_bias_attention.1} parent=5 // pred_region
      %s282 = ssub.s32 %s11, 1
      %p283 = scmp.lt.s32.totalorder %s21, 1
      %s284 = scalar_select %p283, %s21, 1
      %p285 = scmp.lt.s32.totalorder %s22, 0
      %s286 = scalar_select %p285, %s22, 0
      %s287 = smul.addr %s284, 4
      %s288 = sadd.s32 %s286, %s287
      %s289 = smul.addr %s288, 4
      %s290 = scalar_lea.vmem %s0, %s289
      %p291 = pneg %p58
      %p292 = pneg %p55
      %p293 = scmp.lt.s32.totalorder %s21, 1
      %s294 = scalar_select %p293, %s21, 1
      %p295 = scmp.lt.s32.totalorder %s23, 0
      %s296 = scalar_select %p295, %s23, 0
      %s297 = smul.addr %s294, 4
      %s298 = sadd.s32 %s296, %s297
      %s299 = smul.addr %s298, 4
      %s300 = scalar_lea.vmem %s1, %s299
      %p301 = pneg %p86
      %p302 = pneg %p83
      %p303 = scmp.lt.s32.totalorder %s21, 1
      %s304 = scalar_select %p303, %s21, 1
      %p305 = scmp.lt.s32.totalorder %s23, 0
      %s306 = scalar_select %p305, %s23, 0
      %s307 = smul.addr %s304, 4
      %s308 = sadd.s32 %s306, %s307
      %s309 = smul.addr %s308, 4
      %s310 = scalar_lea.vmem %s2, %s309
      %p311 = pneg %p114
      %p312 = pneg %p111
      %p313 = scmp.lt.s32.totalorder %s21, 1
      %s314 = scalar_select %p313, %s21, 1
      %p315 = scmp.lt.s32.totalorder %s22, 0
      %s316 = scalar_select %p315, %s22, 0
      %p317 = scmp.lt.s32.totalorder %s23, 0
      %s318 = scalar_select %p317, %s23, 0
      %s319 = sadd.s32 %s318, %s316
      %s320 = smul.addr %s314, 4
      %s321 = sadd.s32 %s319, %s320
      %s322 = smul.addr %s321, 4
      %s323 = scalar_lea.vmem %s3, %s322
      %p324 = pneg %p144
      %p325 = pneg %p141
      %p326 = scmp.lt.s32.totalorder %s21, 1
      %s327 = scalar_select %p326, %s21, 1
      %p328 = scmp.lt.s32.totalorder %s22, 0
      %s329 = scalar_select %p328, %s22, 0
      %s330 = sadd.s32 %s329, %s327
      %s331 = smul.addr %s330, 4
      %s332 = scalar_lea.vmem %s4, %s331
      %p333 = pneg %p172
      %p334 = pneg %p169
      %p335 = pneg %p200
      %p336 = pneg %p197
      %p337 = scmp.lt.s32.totalorder %s21, 1
      %s338 = scalar_select %p337, %s21, 1
      %p339 = scmp.lt.s32.totalorder %s22, 0
      %s340 = scalar_select %p339, %s22, 0
      %s341 = sadd.s32 %s340, %s338
      %s342 = smul.addr %s341, 4
      %s343 = scalar_lea.vmem %s5, %s342
      %p344 = scmp.lt.s32.totalorder %s21, 1
      %s345 = scalar_select %p344, %s21, 1
      %p346 = scmp.lt.s32.totalorder %s22, 0
      %s347 = scalar_select %p346, %s22, 0
      %s348 = smul.addr %s345, 4
      %s349 = sadd.s32 %s347, %s348
      %s350 = smul.addr %s349, 4
      %s351 = scalar_lea.vmem %s0, %s350
      %p352 = scmp.lt.s32.totalorder %s21, 1
      %s353 = scalar_select %p352, %s21, 1
      %p354 = scmp.lt.s32.totalorder %s23, 0
      %s355 = scalar_select %p354, %s23, 0
      %s356 = smul.addr %s353, 4
      %s357 = sadd.s32 %s355, %s356
      %s358 = smul.addr %s357, 4
      %s359 = scalar_lea.vmem %s1, %s358
      %p360 = scmp.lt.s32.totalorder %s21, 1
      %s361 = scalar_select %p360, %s21, 1
      %p362 = scmp.lt.s32.totalorder %s23, 0
      %s363 = scalar_select %p362, %s23, 0
      %s364 = smul.addr %s361, 4
      %s365 = sadd.s32 %s363, %s364
      %s366 = smul.addr %s365, 4
      %s367 = scalar_lea.vmem %s2, %s366
      %p368 = scmp.lt.s32.totalorder %s21, 1
      %s369 = scalar_select %p368, %s21, 1
      %p370 = scmp.lt.s32.totalorder %s22, 0
      %s371 = scalar_select %p370, %s22, 0
      %p372 = scmp.lt.s32.totalorder %s23, 0
      %s373 = scalar_select %p372, %s23, 0
      %s374 = sadd.s32 %s373, %s371
      %s375 = smul.addr %s369, 4
      %s376 = sadd.s32 %s374, %s375
      %s377 = smul.addr %s376, 4
      %s378 = scalar_lea.vmem %s3, %s377
      %p379 = scmp.lt.s32.totalorder %s21, 1
      %s380 = scalar_select %p379, %s21, 1
      %p381 = scmp.lt.s32.totalorder %s22, 0
      %s382 = scalar_select %p381, %s22, 0
      %s383 = sadd.s32 %s382, %s380
      %s384 = smul.addr %s383, 4
      %s385 = scalar_lea.vmem %s4, %s384
      %p386 = scmp.lt.s32.totalorder %s21, 1
      %s387 = scalar_select %p386, %s21, 1
      %p388 = scmp.lt.s32.totalorder %s22, 0
      %s389 = scalar_select %p388, %s22, 0
      %s390 = sadd.s32 %s389, %s387
      %s391 = smul.addr %s390, 4
      %s392 = scalar_lea.vmem %s5, %s391
      %p394 = scmp.eq.s32.totalorder %s23, 0
      // Predicated region
      $region41: #{pair_bias_attention.1} parent=39 // pred_check
        %p395 = pneg %p394
      $region42: #{pair_bias_attention.1} parent=39 // pred_check_branch
        %397 = sbr.rel (%p395) target = $region44
      $region43: #{pair_bias_attention.1} parent=39 // pred_region
        %vm398 = vcmask 7168
        %399 = vst.msk [vmem:[#allocation2] sm:$0xff] %vm398, -inf
        %400 = vst.msk [vmem:[#allocation2 + $0x8] sm:$0xff] %vm398, -inf
        %401 = vst.msk [vmem:[#allocation2 + $0x10] sm:$0xff] %vm398, -inf
        %402 = vst.msk [vmem:[#allocation2 + $0x18] sm:$0xff] %vm398, -inf
        %403 = vst.msk [vmem:[#allocation3] sm:$0xff] %vm398, 0.0
        %404 = vst.msk [vmem:[#allocation3 + $0x8] sm:$0xff] %vm398, 0.0
        %405 = vst.msk [vmem:[#allocation3 + $0x10] sm:$0xff] %vm398, 0.0
        %406 = vst.msk [vmem:[#allocation3 + $0x18] sm:$0xff] %vm398, 0.0
        %vm407 = vcmask 64512
        %408 = vst.msk [vmem:[#allocation4] sm:$0xff] %vm407, 0.0
        %409 = vst.msk [vmem:[#allocation4 + $0x8] sm:$0xff] %vm407, 0.0
        %410 = vst.msk [vmem:[#allocation4 + $0x10] sm:$0xff] %vm407, 0.0
        %411 = vst.msk [vmem:[#allocation4 + $0x18] sm:$0xff] %vm407, 0.0
      $region44: #{pair_bias_attention.1} parent=39 // pred_fallthru
        _
      %v412 = vld [vmem:[%s351] sm:$0xf]
      %v413 = vld [vmem:[%s351 + $0x4] sm:$0xf]
      %v414 = vld [vmem:[%s351 + $0x8] sm:$0xf]
      %v415 = vld [vmem:[%s351 + $0xc] sm:$0xf]
      %v416 = vld [vmem:[%s359] sm:$0xf]
      %v417 = vld [vmem:[%s359 + $0x4] sm:$0xf]
      %v418 = vld [vmem:[%s359 + $0x8] sm:$0xf]
      %v419 = vld [vmem:[%s359 + $0xc] sm:$0xf]
      %v420 = vld [vmem:[%s378] sm:$0xf]
      %v421 = vld [vmem:[%s378 + $0x4] sm:$0xf]
      %v422 = vld [vmem:[%s378 + $0x8] sm:$0xf]
      %v423 = vld [vmem:[%s378 + $0xc] sm:$0xf]
      %v424 = vunpack.c.l.bf16 %v420
      %v425 = vunpack.c.l.bf16 %v421
      %v426 = vunpack.c.l.bf16 %v422
      %v427 = vunpack.c.l.bf16 %v423
      %vm428 = vcmask 64512
      %v430 = vsel %vm428, %v412, 0
      %vm432 = vcmask 1043456
      %v434 = vsel %vm432, %v416, 0
      %436 = vmatpush.bf16.msra.mxu0 0
      %437 = vmatpush.bf16.msra.mxu0 0
      %438 = vmatpush.bf16.msra.mxu0 0
      %439 = vmatpush.bf16.msra.mxu0 0
      %440 = vmatpush.bf16.msra.mxu0 0
      %441 = vmatpush.bf16.msra.mxu0 0
      %442 = vmatpush.bf16.msra.mxu0 0
      %443 = vmatpush.bf16.msra.mxu0 %v434
      %444 = vmatmul.bf16.gmra.mxu0 %v430
      %v445 = vpop.f32.mrf.mxu0
      %v446 = vadd.f32 %v424, %v445
      %v447 = vpop.f32.mrf.mxu0
      %448 = vdwg.mxu0
      %v450 = vsel %vm428, %v413, 0
      %v453 = vsel %vm432, %v417, 0
      %455 = vmatpush.bf16.msra.mxu0 0
      %456 = vmatpush.bf16.msra.mxu0 0
      %457 = vmatpush.bf16.msra.mxu0 0
      %458 = vmatpush.bf16.msra.mxu0 0
      %459 = vmatpush.bf16.msra.mxu0 0
      %460 = vmatpush.bf16.msra.mxu0 0
      %461 = vmatpush.bf16.msra.mxu0 0
      %462 = vmatpush.bf16.msra.mxu0 %v453
      %463 = vmatmul.bf16.gmra.mxu0 %v450
      %v464 = vpop.f32.mrf.mxu0
      %v465 = vadd.f32 %v425, %v464
      %v466 = vpop.f32.mrf.mxu0
      %467 = vdwg.mxu0
      %v469 = vsel %vm428, %v414, 0
      %v472 = vsel %vm432, %v418, 0
      %474 = vmatpush.bf16.msra.mxu0 0
      %475 = vmatpush.bf16.msra.mxu0 0
      %476 = vmatpush.bf16.msra.mxu0 0
      %477 = vmatpush.bf16.msra.mxu0 0
      %478 = vmatpush.bf16.msra.mxu0 0
      %479 = vmatpush.bf16.msra.mxu0 0
      %480 = vmatpush.bf16.msra.mxu0 0
      %481 = vmatpush.bf16.msra.mxu0 %v472
      %482 = vmatmul.bf16.gmra.mxu0 %v469
      %v483 = vpop.f32.mrf.mxu0
      %v484 = vadd.f32 %v426, %v483
      %v485 = vpop.f32.mrf.mxu0
      %486 = vdwg.mxu0
      %v488 = vsel %vm428, %v415, 0
      %v491 = vsel %vm432, %v419, 0
      %493 = vmatpush.bf16.msra.mxu0 0
      %494 = vmatpush.bf16.msra.mxu0 0
      %495 = vmatpush.bf16.msra.mxu0 0
      %496 = vmatpush.bf16.msra.mxu0 0
      %497 = vmatpush.bf16.msra.mxu0 0
      %498 = vmatpush.bf16.msra.mxu0 0
      %499 = vmatpush.bf16.msra.mxu0 0
      %500 = vmatpush.bf16.msra.mxu0 %v491
      %501 = vmatmul.bf16.gmra.mxu0 %v488
      %v502 = vpop.f32.mrf.mxu0
      %v503 = vadd.f32 %v427, %v502
      %v504 = vpop.f32.mrf.mxu0
      %505 = vdwg.mxu0
      %v506 = vld [vmem:[#allocation2] sm:$0xff]
      %v507 = vld [vmem:[#allocation2 + $0x8] sm:$0xff]
      %v508 = vld [vmem:[#allocation2 + $0x10] sm:$0xff]
      %v509 = vld [vmem:[#allocation2 + $0x18] sm:$0xff]
      %v510 = vsel %vm428, %v446, -inf
      %511 = vmax.xlane.f32.xlu0 %v510
      %v512 = vpop.xlane.xlu0 %511
      %v513 = vsel %vm428, %v465, -inf
      %514 = vmax.xlane.f32.xlu0 %v513
      %v515 = vpop.xlane.xlu0 %514
      %v516 = vsel %vm428, %v484, -inf
      %517 = vmax.xlane.f32.xlu0 %v516
      %v518 = vpop.xlane.xlu0 %517
      %v519 = vsel %vm428, %v503, -inf
      %520 = vmax.xlane.f32.xlu0 %v519
      %v521 = vpop.xlane.xlu0 %520
      %v522 = vmax.f32 %v506, %v512
      %v523 = vmax.f32 %v507, %v515
      %v524 = vmax.f32 %v508, %v518
      %v525 = vmax.f32 %v509, %v521
      %v526 = vsub.f32 %v506, %v522
      %v527 = vsub.f32 %v507, %v523
      %v528 = vsub.f32 %v508, %v524
      %v529 = vsub.f32 %v509, %v525
      %v530 = vmul.f32 %v526, 1.442695
      %v531 = vpow.pop %v530
      %v532 = vmul.f32 %v527, 1.442695
      %v533 = vpow.pop %v532
      %v534 = vmul.f32 %v528, 1.442695
      %v535 = vpow.pop %v534
      %v536 = vmul.f32 %v529, 1.442695
      %v537 = vpow.pop %v536
      %539 = vset.pattern.permute.xlu0 0
      %540 = vperm.xlu0 %539, %v522
      %v541 = vpop.permute.xlu0 %540
      %544 = vset.pattern.permute.xlu0 0
      %545 = vperm.xlu0 %544, %v523
      %v546 = vpop.permute.xlu0 %545
      %549 = vset.pattern.permute.xlu0 0
      %550 = vperm.xlu0 %549, %v524
      %v551 = vpop.permute.xlu0 %550
      %554 = vset.pattern.permute.xlu0 0
      %555 = vperm.xlu0 %554, %v525
      %v556 = vpop.permute.xlu0 %555
      %v558 = vsub.f32 %v446, %v541
      %v559 = vsub.f32 %v465, %v546
      %v560 = vsub.f32 %v484, %v551
      %v561 = vsub.f32 %v503, %v556
      %v562 = vmul.f32 %v558, 1.442695
      %v563 = vpow.pop %v562
      %v564 = vmul.f32 %v559, 1.442695
      %v565 = vpow.pop %v564
      %v566 = vmul.f32 %v560, 1.442695
      %v567 = vpow.pop %v566
      %v568 = vmul.f32 %v561, 1.442695
      %v569 = vpow.pop %v568
      %v570 = vld [vmem:[#allocation3] sm:$0xff]
      %v571 = vld [vmem:[#allocation3 + $0x8] sm:$0xff]
      %v572 = vld [vmem:[#allocation3 + $0x10] sm:$0xff]
      %v573 = vld [vmem:[#allocation3 + $0x18] sm:$0xff]
      %v574 = vmul.f32 %v531, %v570
      %v575 = vmul.f32 %v533, %v571
      %v576 = vmul.f32 %v535, %v572
      %v577 = vmul.f32 %v537, %v573
      %v578 = vsel %vm428, %v563, 0.0
      %579 = vadd.xlane.f32.xlu0 %v578
      %v580 = vpop.xlane.xlu0 %579
      %v581 = vsel %vm428, %v565, 0.0
      %582 = vadd.xlane.f32.xlu0 %v581
      %v583 = vpop.xlane.xlu0 %582
      %v584 = vsel %vm428, %v567, 0.0
      %585 = vadd.xlane.f32.xlu0 %v584
      %v586 = vpop.xlane.xlu0 %585
      %v587 = vsel %vm428, %v569, 0.0
      %588 = vadd.xlane.f32.xlu0 %v587
      %v589 = vpop.xlane.xlu0 %588
      %v590 = vadd.f32 %v574, %v580
      %v591 = vadd.f32 %v575, %v583
      %v592 = vadd.f32 %v576, %v586
      %v593 = vadd.f32 %v577, %v589
      %vm594 = vcmask 7168
      %595 = vst.msk [vmem:[#allocation3] sm:$0xff] %vm594, %v590
      %596 = vst.msk [vmem:[#allocation3 + $0x8] sm:$0xff] %vm594, %v591
      %597 = vst.msk [vmem:[#allocation3 + $0x10] sm:$0xff] %vm594, %v592
      %598 = vst.msk [vmem:[#allocation3 + $0x18] sm:$0xff] %vm594, %v593
      %v599 = vpack.c.bf16 %v563, %v563
      %v600 = vpack.c.bf16 %v565, %v565
      %v601 = vpack.c.bf16 %v567, %v567
      %v602 = vpack.c.bf16 %v569, %v569
      %v603 = vld [vmem:[%s367] sm:$0xf]
      %v604 = vld [vmem:[%s367 + $0x4] sm:$0xf]
      %v605 = vld [vmem:[%s367 + $0x8] sm:$0xf]
      %v606 = vld [vmem:[%s367 + $0xc] sm:$0xf]
      %v608 = vsel %vm428, %v599, 0
      %v611 = vsel %vm432, %v603, 0
      %613 = vmatpush.bf16.msra.mxu0 0
      %614 = vmatpush.bf16.msra.mxu0 0
      %615 = vmatpush.bf16.msra.mxu0 0
      %616 = vmatpush.bf16.msra.mxu0 0
      %617 = vmatpush.bf16.msra.mxu0 0
      %618 = vmatpush.bf16.msra.mxu0 0
      %619 = vmatpush.bf16.msra.mxu0 0
      %620 = vmatpush.bf16.msra.mxu0 %v611
      %621 = vmatmul.bf16.gmra.mxu0 %v608
      %v622 = vpop.f32.mrf.mxu0
      %v623 = vadd.f32 0.0, %v622
      %v624 = vpop.f32.mrf.mxu0
      %625 = vdwg.mxu0
      %v627 = vsel %vm428, %v600, 0
      %v630 = vsel %vm432, %v604, 0
      %632 = vmatpush.bf16.msra.mxu0 0
      %633 = vmatpush.bf16.msra.mxu0 0
      %634 = vmatpush.bf16.msra.mxu0 0
      %635 = vmatpush.bf16.msra.mxu0 0
      %636 = vmatpush.bf16.msra.mxu0 0
      %637 = vmatpush.bf16.msra.mxu0 0
      %638 = vmatpush.bf16.msra.mxu0 0
      %639 = vmatpush.bf16.msra.mxu0 %v630
      %640 = vmatmul.bf16.gmra.mxu0 %v627
      %v641 = vpop.f32.mrf.mxu0
      %v642 = vadd.f32 0.0, %v641
      %v643 = vpop.f32.mrf.mxu0
      %644 = vdwg.mxu0
      %v646 = vsel %vm428, %v601, 0
      %v649 = vsel %vm432, %v605, 0
      %651 = vmatpush.bf16.msra.mxu0 0
      %652 = vmatpush.bf16.msra.mxu0 0
      %653 = vmatpush.bf16.msra.mxu0 0
      %654 = vmatpush.bf16.msra.mxu0 0
      %655 = vmatpush.bf16.msra.mxu0 0
      %656 = vmatpush.bf16.msra.mxu0 0
      %657 = vmatpush.bf16.msra.mxu0 0
      %658 = vmatpush.bf16.msra.mxu0 %v649
      %659 = vmatmul.bf16.gmra.mxu0 %v646
      %v660 = vpop.f32.mrf.mxu0
      %v661 = vadd.f32 0.0, %v660
      %v662 = vpop.f32.mrf.mxu0
      %663 = vdwg.mxu0
      %v665 = vsel %vm428, %v602, 0
      %v668 = vsel %vm432, %v606, 0
      %670 = vmatpush.bf16.msra.mxu0 0
      %671 = vmatpush.bf16.msra.mxu0 0
      %672 = vmatpush.bf16.msra.mxu0 0
      %673 = vmatpush.bf16.msra.mxu0 0
      %674 = vmatpush.bf16.msra.mxu0 0
      %675 = vmatpush.bf16.msra.mxu0 0
      %676 = vmatpush.bf16.msra.mxu0 0
      %677 = vmatpush.bf16.msra.mxu0 %v668
      %678 = vmatmul.bf16.gmra.mxu0 %v665
      %v679 = vpop.f32.mrf.mxu0
      %v680 = vadd.f32 0.0, %v679
      %v681 = vpop.f32.mrf.mxu0
      %682 = vdwg.mxu0
      %v683 = vld [vmem:[#allocation4] sm:$0xff]
      %v684 = vld [vmem:[#allocation4 + $0x8] sm:$0xff]
      %v685 = vld [vmem:[#allocation4 + $0x10] sm:$0xff]
      %v686 = vld [vmem:[#allocation4 + $0x18] sm:$0xff]
      %688 = vset.pattern.permute.xlu0 0
      %689 = vperm.xlu0 %688, %v531
      %v690 = vpop.permute.xlu0 %689
      %693 = vset.pattern.permute.xlu0 0
      %694 = vperm.xlu0 %693, %v533
      %v695 = vpop.permute.xlu0 %694
      %698 = vset.pattern.permute.xlu0 0
      %699 = vperm.xlu0 %698, %v535
      %v700 = vpop.permute.xlu0 %699
      %703 = vset.pattern.permute.xlu0 0
      %704 = vperm.xlu0 %703, %v537
      %v705 = vpop.permute.xlu0 %704
      %v707 = vmul.f32 %v690, %v683
      %v708 = vmul.f32 %v695, %v684
      %v709 = vmul.f32 %v700, %v685
      %v710 = vmul.f32 %v705, %v686
      %v711 = vadd.f32 %v707, %v623
      %v712 = vadd.f32 %v708, %v642
      %v713 = vadd.f32 %v709, %v661
      %v714 = vadd.f32 %v710, %v680
      %715 = vst.msk [vmem:[#allocation4] sm:$0xff] %vm428, %v711
      %716 = vst.msk [vmem:[#allocation4 + $0x8] sm:$0xff] %vm428, %v712
      %717 = vst.msk [vmem:[#allocation4 + $0x10] sm:$0xff] %vm428, %v713
      %718 = vst.msk [vmem:[#allocation4 + $0x18] sm:$0xff] %vm428, %v714
      %719 = vst.msk [vmem:[#allocation2] sm:$0xff] %vm594, %v522
      %720 = vst.msk [vmem:[#allocation2 + $0x8] sm:$0xff] %vm594, %v523
      %721 = vst.msk [vmem:[#allocation2 + $0x10] sm:$0xff] %vm594, %v524
      %722 = vst.msk [vmem:[#allocation2 + $0x18] sm:$0xff] %vm594, %v525
      // Predicated region
      $region45: #{pair_bias_attention.1} parent=39 // pred_check
        %p723 = pneg %p394
      $region46: #{pair_bias_attention.1} parent=39 // pred_check_branch
        %725 = sbr.rel (%p723) target = $region48
      $region47: #{pair_bias_attention.1} parent=39 // pred_region
        %v726 = vld [vmem:[#allocation4] sm:$0xff]
        %v727 = vld [vmem:[#allocation4 + $0x8] sm:$0xff]
        %v728 = vld [vmem:[#allocation4 + $0x10] sm:$0xff]
        %v729 = vld [vmem:[#allocation4 + $0x18] sm:$0xff]
        %v730 = vld [vmem:[#allocation3] sm:$0xff]
        %v731 = vld [vmem:[#allocation3 + $0x8] sm:$0xff]
        %v732 = vld [vmem:[#allocation3 + $0x10] sm:$0xff]
        %v733 = vld [vmem:[#allocation3 + $0x18] sm:$0xff]
        %v734 = vrcp.pop %v730
        %v735 = vrcp.pop %v731
        %v736 = vrcp.pop %v732
        %v737 = vrcp.pop %v733
        %739 = vset.pattern.permute.xlu0 0
        %740 = vperm.xlu0 %739, %v734
        %v741 = vpop.permute.xlu0 %740
        %744 = vset.pattern.permute.xlu0 0
        %745 = vperm.xlu0 %744, %v735
        %v746 = vpop.permute.xlu0 %745
        %749 = vset.pattern.permute.xlu0 0
        %750 = vperm.xlu0 %749, %v736
        %v751 = vpop.permute.xlu0 %750
        %754 = vset.pattern.permute.xlu0 0
        %755 = vperm.xlu0 %754, %v737
        %v756 = vpop.permute.xlu0 %755
        %v758 = vmul.f32 %v726, %v741
        %v759 = vmul.f32 %v727, %v746
        %v760 = vmul.f32 %v728, %v751
        %v761 = vmul.f32 %v729, %v756
        %763 = vrot.lane.b32.xlu0 %v759, 8
        %v764 = vpop.permute.xlu0 %763
        %767 = vrot.lane.b32.xlu0 %v760, 16
        %v768 = vpop.permute.xlu0 %767
        %771 = vrot.lane.b32.xlu0 %v761, 24
        %v772 = vpop.permute.xlu0 %771
        %v774 = vsel %vm428, %v758, %v764
        %vm775 = vcmask 130048
        %v776 = vsel %vm775, %v774, %v768
        %vm777 = vcmask 195584
        %v778 = vsel %vm777, %v776, %v772
        %v779 = vld [vmem:[%s385] sm:$0xf]
        %v780 = vunpack.c.l.bf16 %v779
        %v781 = vxor.u32 %v780, 2147483648
        %v782 = vmul.f32 %v781, 1.442695
        %v783 = vpow.pop %v782
        %v784 = vadd.f32 %v783, 1.0
        %v785 = vrcp.pop %v784
        %v786 = vmul.f32 %v784, %v785
        %v787 = vsub.f32 1.0, %v786
        %v788 = vmul.f32 %v785, %v787
        %v789 = vadd.f32 %v785, %v788
        %vm790 = vweird.f32 %v784
        %vm791 = vweird.f32 %v785
        %vm792 = vmor %vm790, %vm791
        %v793 = vsel %vm792, %v785, %v789
        %v794 = vand.u32 2147483647, %v784
        %vm795 = vcmp.eq.f32.partialorder %v794, 8.507059e+37
        %v796 = vand.u32 %v784, 2147483648
        %v797 = vor.u32 1.1754944e-38, %v796
        %v798 = vsel %vm795, %v797, %v793
        %v799 = vmul.f32 1.0, %v798
        %v800 = vmul.f32 %v799, %v778
        %v801 = vpack.c.bf16 %v800, %v800
        %vm802 = vcmask 257024
        %803 = vst.msk [vmem:[%s392] sm:$0xf] %vm802, %v801
      $region48: #{pair_bias_attention.1} parent=39 // pred_fallthru
        _
      %p804 = scmp.lt.s32.totalorder %s21, 1
      %s805 = scalar_select %p804, %s21, 1
      %p806 = scmp.lt.s32.totalorder %s22, 0
      %s807 = scalar_select %p806, %s22, 0
      %s808 = sadd.s32 %s807, %s805
      %s809 = smul.addr %s808, 4
      %s810 = scalar_lea.vmem %s5, %s809
      // Predicated region
      $region49: #{pair_bias_attention.1} parent=39 // pred_check
        %p811 = pneg %p197
      $region50: #{pair_bias_attention.1} parent=39 // pred_check_branch
        %813 = sbr.rel (%p811) target = $region52
      $region51: #{pair_bias_attention.1} parent=39 // pred_region
        _
      $region52: #{pair_bias_attention.1} parent=39 // pred_fallthru
        _
    $region40: #{pair_bias_attention.1} parent=5 // pred_fallthru
      _
    %p814 = scmp.le.s32.totalorder 2, %s11
    // Predicated region
    $region53: #{pair_bias_attention.1} parent=5 // pred_check
      %p815 = pneg %p814
    $region54: #{pair_bias_attention.1} parent=5 // pred_check_branch
      %817 = sbr.rel (%p815) target = $region56
    $region55: #{pair_bias_attention.1} parent=5 // pred_region
      %s818 = ssub.s32 %s11, 2
      // Predicated region
      $region57: #{pair_bias_attention.1} parent=55 // pred_check
        %p819 = pneg %p203
      $region58: #{pair_bias_attention.1} parent=55 // pred_check_branch
        %821 = sbr.rel (%p819) target = $region60
      $region59: #{pair_bias_attention.1} parent=55 // pred_region
        %p822 = scmp.lt.s32.totalorder %s24, 1
        %s823 = scalar_select %p822, %s24, 1
        %p824 = scmp.lt.s32.totalorder %s25, 0
        %s825 = scalar_select %p824, %s25, 0
        %s826 = sadd.s32 %s825, %s823
        %s827 = smul.addr %s826, 4
        %s828 = scalar_lea.vmem %s5, %s827
      $region60: #{pair_bias_attention.1} parent=55 // pred_fallthru
        _
    $region56: #{pair_bias_attention.1} parent=5 // pred_fallthru
      _
  $region6: #{pair_bias_attention.1} parent=0 // loop_footer
    %s15 = sadd.s32 1, %s11
  $region7: #{pair_bias_attention.1} parent=0 // loop_footer_branch
    %10 = sbr.rel target = $region3
  $region8: #{pair_bias_attention.1} parent=0 // loop_exit
    _

</llo_original>
